<compile_context>
chip_gen: v5e
topology: v5e:2x2
jax: 0.10.0
libtpu: 0.0.40
codegen_flags: <defaults>
</compile_context>

<pallas_src>
import functools

import jax
import jax.numpy as jnp
from jax.experimental import pallas as pl
from jax.experimental.pallas import tpu as pltpu

BN_EPS = 1e-5
VMEM_LIMIT = 48 * 1024 * 1024  # safe on v7x (64 MiB/TC); plenty under v5e/v6e.


def _round_up(x, m):
    return (x + m - 1) // m * m


# ----------------------------------------------------------------------------
# Pallas kernel 1: GEMM (full-K, weight VMEM-resident) + per-M-tile BN stats
# ----------------------------------------------------------------------------
def _gemm_stats_kernel(p_ref, w_ref, y_ref, st_ref, *, m_true, tile_m):
    mi = pl.program_id(0)  # top-level only (not inside pl.when) -> lowers everywhere

    # bf16 x bf16 -> f32 on the MXU; full K depth in one shot.
    y = jnp.dot(p_ref[...], w_ref[...], preferred_element_type=jnp.float32)
    y_ref[...] = y.astype(y_ref.dtype)

    # Per-tile BN partial statistics from the f32 result (robust: rows beyond
    # m_true are explicitly masked, tile-centered M2 combined in glue).
    row = jax.lax.broadcasted_iota(jnp.int32, (tile_m, 1), 0) + mi * tile_m
    valid = (row < m_true).astype(jnp.float32)
    cnt = jnp.maximum(jnp.minimum(tile_m, m_true - mi * tile_m), 1).astype(
        jnp.float32
    )

    ym = y * valid
    col_sum = jnp.sum(ym, axis=0, keepdims=True)          # (1, Cp)
    col_mean = col_sum / cnt
    d = (ym - col_mean) * valid
    col_m2 = jnp.sum(d * d, axis=0, keepdims=True)         # (1, Cp)

    st_ref[...] = jnp.concatenate([col_sum, col_m2], axis=0)[None]  # (1, 2, Cp)


# ----------------------------------------------------------------------------
# Pallas kernel 2: folded-BN apply (+ fused residual-BN) (+ ReLU)
# ----------------------------------------------------------------------------
def _bn_apply_kernel(y_ref, sc_ref, bi_ref, *rest, relu, has_residual):
    out_ref = rest[-1]
    out = y_ref[...].astype(jnp.float32) * sc_ref[...] + bi_ref[...]
    if has_residual:
        r_ref, rs_ref, rb_ref = rest[0], rest[1], rest[2]
        out = out + r_ref[...].astype(jnp.float32) * rs_ref[...] + rb_ref[...]
    if relu:
        out = jnp.maximum(out, 0.0)
    out_ref[...] = out.astype(out_ref.dtype)


# ----------------------------------------------------------------------------
# Tiling choice (shared by all three GEMMs of the block so Mp matches)
# ----------------------------------------------------------------------------
def _choose_tm(M, Kp, Cp):
    tm = min(1024, _round_up(M, 8))

    # Keep (double-buffered LHS tile + resident weight + outputs + f32 temps)
    # under a conservative ~40 MiB so the tiling also fits v7x's 64 MiB VMEM.
    def vmem(t):
        return (2 * t * Kp * 2      # LHS bf16, double-buffered
                + 2 * Kp * Cp * 2   # resident weight bf16 (conservative x2)
                + 2 * t * Cp * 2    # y bf16, double-buffered
                + 4 * t * Cp)       # f32 temps

    while tm > 8 and vmem(tm) > 40 * 1024 * 1024:
        tm = max(8, _round_up(tm // 2, 8))

    # v7x has 2 TensorCores: make sure the 'parallel' M axis has >= 2 tiles.
    if _round_up(M, tm) // tm < 2 and M >= 16:
        tm = _round_up(pl.cdiv(M, 2), 8)
    return tm


# ----------------------------------------------------------------------------
# GEMM + BN batch statistics -> folded per-channel (scale, bias)
# ----------------------------------------------------------------------------
def _gemm_bn_stats(p, w, gamma, beta, *, m_true, tm):
    Mp, Kp = p.shape
    _, Cp = w.shape
    num_m = Mp // tm
    Cout = gamma.shape[0]

    bytes_accessed = Mp * Kp * 2 + Kp * Cp * 2 + Mp * Cp * 2 + num_m * 2 * Cp * 4
    y, part = pl.pallas_call(
        functools.partial(_gemm_stats_kernel, m_true=m_true, tile_m=tm),
        out_shape=(
            jax.ShapeDtypeStruct((Mp, Cp), jnp.bfloat16),
            jax.ShapeDtypeStruct((num_m, 2, Cp), jnp.float32),
        ),
        grid=(num_m,),
        in_specs=[
            pl.BlockSpec((tm, Kp), lambda m: (m, 0)),
            # Constant index_map -> weight stays VMEM-resident across M tiles.
            pl.BlockSpec((Kp, Cp), lambda m: (0, 0)),
        ],
        out_specs=[
            pl.BlockSpec((tm, Cp), lambda m: (m, 0)),
            pl.BlockSpec((1, 2, Cp), lambda m: (m, 0, 0)),
        ],
        compiler_params=pltpu.CompilerParams(
            dimension_semantics=("parallel",),
            vmem_limit_bytes=VMEM_LIMIT,
        ),
        cost_estimate=pl.CostEstimate(
            flops=2 * Mp * Kp * Cp, transcendentals=0,
            bytes_accessed=bytes_accessed),
    )(p, w)

    # --- combine per-tile stats -> global batch mean / biased variance (O(C))
    counts = jnp.asarray(
        [max(1, min(tm, m_true - i * tm)) for i in range(num_m)], jnp.float32
    )[:, None]
    tile_sum, tile_m2 = part[:, 0, :], part[:, 1, :]
    mean = jnp.sum(tile_sum, axis=0) / m_true
    tile_mean = tile_sum / counts
    m2 = jnp.sum(tile_m2, axis=0) + jnp.sum(
        counts * (tile_mean - mean[None, :]) ** 2, axis=0
    )
    var = m2 / m_true

    # --- fold BN affine into per-channel scale / bias ------------------------
    g = jnp.pad(gamma.astype(jnp.float32), (0, Cp - Cout))
    b = jnp.pad(beta.astype(jnp.float32), (0, Cp - Cout))
    scale = g * jax.lax.rsqrt(var + BN_EPS)
    bias = b - mean * scale
    return y, scale, bias


# ----------------------------------------------------------------------------
# Tiled BN apply (+ optional fused residual BN) (+ ReLU)
# ----------------------------------------------------------------------------
def _bn_apply(y, scale, bias, *, tm, relu, out_dtype,
              residual=None, res_scale=None, res_bias=None):
    Mp, Cp = y.shape
    num_m = Mp // tm
    has_res = residual is not None

    args = [y, scale.reshape(1, Cp), bias.reshape(1, Cp)]
    in_specs = [
        pl.BlockSpec((tm, Cp), lambda m: (m, 0)),
        pl.BlockSpec((1, Cp), lambda m: (0, 0)),
        pl.BlockSpec((1, Cp), lambda m: (0, 0)),
    ]
    if has_res:
        args += [residual, res_scale.reshape(1, Cp), res_bias.reshape(1, Cp)]
        in_specs += [
            pl.BlockSpec((tm, Cp), lambda m: (m, 0)),
            pl.BlockSpec((1, Cp), lambda m: (0, 0)),
            pl.BlockSpec((1, Cp), lambda m: (0, 0)),
        ]

    return pl.pallas_call(
        functools.partial(_bn_apply_kernel, relu=relu, has_residual=has_res),
        out_shape=jax.ShapeDtypeStruct((Mp, Cp), out_dtype),
        grid=(num_m,),
        in_specs=in_specs,
        out_specs=pl.BlockSpec((tm, Cp), lambda m: (m, 0)),
        compiler_params=pltpu.CompilerParams(
            dimension_semantics=("parallel",),
            vmem_limit_bytes=VMEM_LIMIT,
        ),
    )(*args)


# ----------------------------------------------------------------------------
# Glue: im2col that emits the padded (Mp, Kp) bf16 buffer directly
# ----------------------------------------------------------------------------
def _im2col_padded(x_nhwc, ksize, stride, Mp, Kp):
    N, H, W, C = x_nhwc.shape
    pad = (ksize - 1) // 2
    xp = jnp.pad(x_nhwc, ((0, 0), (pad, pad), (pad, pad), (0, 0)))
    Ho = (H + 2 * pad - ksize) // stride + 1
    Wo = (W + 2 * pad - ksize) // stride + 1
    cols = []
    for ky in range(ksize):
        for kx in range(ksize):
            cols.append(
                xp[:, ky: ky + stride * (Ho - 1) + 1: stride,
                      kx: kx + stride * (Wo - 1) + 1: stride, :])
    patches = jnp.stack(cols, axis=3).reshape(N * Ho * Wo, ksize * ksize * C)
    M, K = N * Ho * Wo, ksize * ksize * C
    # Single padded materialization (no patch-then-copy).
    return jnp.pad(patches, ((0, Mp - M), (0, Kp - K)))


def _pad_weight(w_oihw, Kp, Cp):
    Cout, Cin, kh, kw = w_oihw.shape
    K = kh * kw * Cin
    w_mat = jnp.transpose(w_oihw, (2, 3, 1, 0)).reshape(K, Cout)  # (ky,kx,ci)->co
    return jnp.pad(w_mat.astype(jnp.bfloat16), ((0, Kp - K), (0, Cp - Cout)))


# ----------------------------------------------------------------------------
# BasicBlock forward (training-mode BatchNorm batch stats, like the reference)
# ----------------------------------------------------------------------------
def basic_block_forward(x_nchw, params, *, in_planes, planes, stride):
    x = jnp.transpose(x_nchw, (0, 2, 3, 1)).astype(jnp.float32)  # NHWC
    x_bf = x.astype(jnp.bfloat16)
    N, H, W, _ = x.shape

    Ho = (H - 1) // stride + 1
    Wo = (W - 1) // stride + 1
    M = N * Ho * Wo
    Cout = planes
    Cp = _round_up(Cout, 128)
    Kp1 = _round_up(9 * in_planes, 128)
    Kp2 = _round_up(9 * planes, 128)
    Kps = _round_up(in_planes, 128)

    TM = _choose_tm(M, max(Kp1, Kp2, Kps), Cp)
    Mp = _round_up(M, TM)

    use_proj = (stride != 1) or (in_planes != planes)

    # --- conv1 (3x3, stride) + bn1 + relu ------------------------------------
    p1 = _im2col_padded(x_bf, 3, stride, Mp, Kp1)
    w1 = _pad_weight(params["w1"], Kp1, Cp)
    y1, s1, b1 = _gemm_bn_stats(p1, w1, params["g1"], params["b1"],
                                m_true=M, tm=TM)
    out1 = _bn_apply(y1, s1, b1, tm=TM, relu=True, out_dtype=jnp.bfloat16)

    # --- shortcut branch (raw GEMM + folded BN fused into conv2's apply) -----
    if use_proj:
        ps = _im2col_padded(x_bf, 1, stride, Mp, Kps)
        ws = _pad_weight(params["ws"], Kps, Cp)
        res, ss, bs = _gemm_bn_stats(ps, ws, params["gs"], params["bs"],
                                     m_true=M, tm=TM)
    else:
        res = jnp.pad(x_bf.reshape(M, in_planes),
                      ((0, Mp - M), (0, Cp - in_planes)))
        ss = jnp.ones((Cp,), jnp.float32)
        bs = jnp.zeros((Cp,), jnp.float32)

    # --- conv2 (3x3, stride 1) + bn2 + shortcut + relu (single apply pass) ---
    out1_img = out1[:M, :Cout].reshape(N, Ho, Wo, Cout)
    p2 = _im2col_padded(out1_img, 3, 1, Mp, Kp2)
    w2 = _pad_weight(params["w2"], Kp2, Cp)
    y2, s2, b2 = _gemm_bn_stats(p2, w2, params["g2"], params["b2"],
                                m_true=M, tm=TM)
    out2 = _bn_apply(y2, s2, b2, tm=TM, relu=True, out_dtype=jnp.float32,
                     residual=res, res_scale=ss, res_bias=bs)

    out_nhwc = out2[:M, :Cout].reshape(N, Ho, Wo, Cout)
    return jnp.transpose(out_nhwc, (0, 3, 1, 2))  # back to NCHW


# ----------------------------------------------------------------------------
# Pure-JAX reference (for correctness check)
# ----------------------------------------------------------------------------
def _ref_conv(x_nchw, w, stride, pad):
    return jax.lax.conv_general_dilated(
        x_nchw, w, (stride, stride), [(pad, pad), (pad, pad)],
        dimension_numbers=("NCHW", "OIHW", "NCHW"),
    )


def _ref_bn(y_nchw, g, b):
    mean = jnp.mean(y_nchw, axis=(0, 2, 3), keepdims=True)
    var = jnp.mean((y_nchw - mean) ** 2, axis=(0, 2, 3), keepdims=True)
    return g[None, :, None, None] * (y_nchw - mean) * jax.lax.rsqrt(
        var + BN_EPS
    ) + b[None, :, None, None]


def basic_block_reference(x, params, *, in_planes, planes, stride):
    out = jax.nn.relu(_ref_bn(_ref_conv(x, params["w1"], stride, 1),
                              params["g1"], params["b1"]))
    out = _ref_bn(_ref_conv(out, params["w2"], 1, 1), params["g2"], params["b2"])
    if stride != 1 or in_planes != planes:
        sc = _ref_bn(_ref_conv(x, params["ws"], stride, 0),
                     params["gs"], params["bs"])
    else:
        sc = x
    return jax.nn.relu(out + sc)


def _make_params(key, in_planes, planes):
    ks = jax.random.split(key, 9)
    return {
        "w1": 0.1 * jax.random.normal(ks[0], (planes, in_planes, 3, 3), jnp.float32),
        "w2": 0.1 * jax.random.normal(ks[1], (planes, planes, 3, 3), jnp.float32),
        "ws": 0.1 * jax.random.normal(ks[2], (planes, in_planes, 1, 1), jnp.float32),
        "g1": 1.0 + 0.1 * jax.random.normal(ks[3], (planes,), jnp.float32),
        "b1": 0.1 * jax.random.normal(ks[4], (planes,), jnp.float32),
        "g2": 1.0 + 0.1 * jax.random.normal(ks[5], (planes,), jnp.float32),
        "b2": 0.1 * jax.random.normal(ks[6], (planes,), jnp.float32),
        "gs": 1.0 + 0.1 * jax.random.normal(ks[7], (planes,), jnp.float32),
        "bs": 0.1 * jax.random.normal(ks[8], (planes,), jnp.float32),
    }


# ----------------------------------------------------------------------------
if __name__ == "__main__":
    key = jax.random.PRNGKey(0)
    k_cfg = jax.random.split(key, 4)

    # Test 1: stride=2 projection-shortcut path.
    in_planes, planes, stride = 4, 8, 2
    N, H, W = 2, 16, 16
    x = jax.random.normal(k_cfg[0], (N, in_planes, H, W), jnp.float32)
    params = _make_params(k_cfg[1], in_planes, planes)
    out = jax.block_until_ready(
        basic_block_forward(x, params, in_planes=in_planes, planes=planes,
                            stride=stride))
    ref = basic_block_reference(x, params, in_planes=in_planes, planes=planes,
                                stride=stride)
    assert out.shape == (N, planes, H // stride, W // stride)
    # bf16 MXU operands + bf16 intermediates shift numerics vs the f32 reference.
    assert jnp.allclose(out, ref, atol=5e-2, rtol=5e-2), float(
        jnp.max(jnp.abs(out - ref)))

    # Test 2: stride=1 identity-shortcut path.
    in_planes2, planes2, stride2 = 8, 8, 1
    x2 = jax.random.normal(k_cfg[2], (N, in_planes2, H, W), jnp.float32)
    params2 = _make_params(k_cfg[3], in_planes2, planes2)
    out2 = jax.block_until_ready(
        basic_block_forward(x2, params2, in_planes=in_planes2, planes=planes2,
                            stride=stride2))
    ref2 = basic_block_reference(x2, params2, in_planes=in_planes2,
                                 planes=planes2, stride=stride2)
    assert out2.shape == (N, planes2, H, W)
    assert jnp.allclose(out2, ref2, atol=5e-2, rtol=5e-2), float(
        jnp.max(jnp.abs(out2 - ref2)))

    print("KERNEL_OK")
</pallas_src>

<mosaic_0001>
module attributes {stable_mosaic.version = 11 : i64} {
  func.func @_gemm_stats_kernel(%arg0: i32, %arg1: memref<64x128xbf16, #tpu.memory_space<vmem>>, %arg2: memref<128x128xbf16, #tpu.memory_space<vmem>>, %arg3: memref<64x128xbf16, #tpu.memory_space<vmem>>, %arg4: memref<1x2x128xf32, #tpu.memory_space<vmem>>) attributes {dimension_semantics = [#tpu.dimension_semantics<parallel>], iteration_bounds = array<i64: 2>, scalar_prefetch = 0 : i64, scratch_operands = 0 : i64, tpu.core_type = #tpu.core_type<tc>, window_params = [{transform_indices = @transform_0, window_bounds = array<i64: 64, 128>}, {pipeline_mode = #tpu.pipeline_mode<synchronous>, transform_indices = @transform_1, window_bounds = array<i64: 128, 128>}, {transform_indices = @transform_2, window_bounds = array<i64: 64, 128>}, {transform_indices = @transform_3, window_bounds = array<i64: 1, 2, 128>}]} {
    %c0 = arith.constant 0 : index
    %c0_0 = arith.constant 0 : index
    %0 = vector.load %arg1[%c0, %c0_0] : memref<64x128xbf16, #tpu.memory_space<vmem>>, vector<64x128xbf16>
    %c0_1 = arith.constant 0 : index
    %c0_2 = arith.constant 0 : index
    %1 = vector.load %arg2[%c0_1, %c0_2] : memref<128x128xbf16, #tpu.memory_space<vmem>>, vector<128x128xbf16>
    %cst = arith.constant dense<0.000000e+00> : vector<64x128xf32>
    %2 = tpu.matmul %0, %1, %cst {dimension_numbers = #tpu.dot_dimension_numbers<[1], [0], [0], [1], [0, 0, 1, 1], [], []>} : vector<64x128xbf16>, vector<128x128xbf16>, vector<64x128xf32> -> vector<64x128xf32>
    %3 = arith.truncf %2 : vector<64x128xf32> to vector<64x128xbf16>
    %c0_3 = arith.constant 0 : index
    %c0_4 = arith.constant 0 : index
    %4 = vector.load %arg3[%c0_3, %c0_4] : memref<64x128xbf16, #tpu.memory_space<vmem>>, vector<64x128xbf16>
    tpu.vector_store %arg3[%c0_3, %c0_4], %3 {strides = array<i32>} : memref<64x128xbf16, #tpu.memory_space<vmem>>, vector<64x128xbf16>,
    %5 = tpu.iota {dimensions = array<i32: 0>} : vector<64x1xi32>
    %c64_i32 = arith.constant 64 : i32
    %6 = arith.muli %arg0, %c64_i32 : i32
    %7 = vector.broadcast %6 : i32 to vector<64x1xi32>
    %8 = arith.addi %5, %7 : vector<64x1xi32>
    %c128_i32 = arith.constant 128 : i32
    %9 = vector.broadcast %c128_i32 : i32 to vector<64x1xi32>
    %10 = arith.cmpi slt, %8, %9 : vector<64x1xi32>
    %11 = arith.extui %10 : vector<64x1xi1> to vector<64x1xi32>
    %12 = arith.sitofp %11 : vector<64x1xi32> to vector<64x1xf32>
    %c64_i32_5 = arith.constant 64 : i32
    %13 = arith.muli %arg0, %c64_i32_5 : i32
    %c128_i32_6 = arith.constant 128 : i32
    %14 = arith.subi %c128_i32_6, %13 : i32
    %c64_i32_7 = arith.constant 64 : i32
    %15 = arith.minsi %c64_i32_7, %14 : i32
    %c1_i32 = arith.constant 1 : i32
    %16 = arith.maxsi %15, %c1_i32 : i32
    %17 = arith.sitofp %16 : i32 to f32
    %18 = vector.broadcast %12 : vector<64x1xf32> to vector<64x128xf32>
    %19 = arith.mulf %2, %18 : vector<64x128xf32>
    %cst_8 = arith.constant dense<0.000000e+00> : vector<128xf32>
    %20 = vector.multi_reduction <add>, %19, %cst_8 [0] : vector<64x128xf32> to vector<128xf32>
    %21 = vector.shape_cast %20 : vector<128xf32> to vector<1x128xf32>
    %22 = vector.broadcast %17 : f32 to vector<1x128xf32>
    %23 = arith.divf %21, %22 : vector<1x128xf32>
    %24 = vector.broadcast %23 : vector<1x128xf32> to vector<64x128xf32>
    %25 = arith.subf %19, %24 : vector<64x128xf32>
    %26 = vector.broadcast %12 : vector<64x1xf32> to vector<64x128xf32>
    %27 = arith.mulf %25, %26 : vector<64x128xf32>
    %28 = arith.mulf %27, %27 : vector<64x128xf32>
    %cst_9 = arith.constant dense<0.000000e+00> : vector<128xf32>
    %29 = vector.multi_reduction <add>, %28, %cst_9 [0] : vector<64x128xf32> to vector<128xf32>
    %30 = vector.shape_cast %29 : vector<128xf32> to vector<1x128xf32>
    %31 = tpu.concatenate %21, %30 in 0 : vector<1x128xf32>, vector<1x128xf32> -> vector<2x128xf32>
    %32 = vector.shape_cast %31 : vector<2x128xf32> to vector<1x2x128xf32>
    %c0_10 = arith.constant 0 : index
    %c0_11 = arith.constant 0 : index
    %c0_12 = arith.constant 0 : index
    %33 = vector.load %arg4[%c0_10, %c0_11, %c0_12] : memref<1x2x128xf32, #tpu.memory_space<vmem>>, vector<1x2x128xf32>
    tpu.vector_store %arg4[%c0_10, %c0_11, %c0_12], %32 {strides = array<i32>} : memref<1x2x128xf32, #tpu.memory_space<vmem>>, vector<1x2x128xf32>,
    return
  }
  func.func @transform_0(%arg0: i32) -> (i32, i32) {
    %c0_i32 = arith.constant 0 : i32
    %c0_i32_0 = arith.constant 0 : i32
    return %arg0, %c0_i32 : i32, i32
  }
  func.func @transform_1(%arg0: i32) -> (i32, i32) {
    %c0_i32 = arith.constant 0 : i32
    %c0_i32_0 = arith.constant 0 : i32
    %c0_i32_1 = arith.constant 0 : i32
    return %c0_i32, %c0_i32_0 : i32, i32
  }
  func.func @transform_2(%arg0: i32) -> (i32, i32) {
    %c0_i32 = arith.constant 0 : i32
    %c0_i32_0 = arith.constant 0 : i32
    return %arg0, %c0_i32 : i32, i32
  }
  func.func @transform_3(%arg0: i32) -> (i32, i32, i32) {
    %c0_i32 = arith.constant 0 : i32
    %c0_i32_0 = arith.constant 0 : i32
    %c0_i32_1 = arith.constant 0 : i32
    return %arg0, %c0_i32, %c0_i32_0 : i32, i32, i32
  }
}

</mosaic_0001>

<llo_original>
// kernel: tpu_custom_call.1
$region0: #{tpu_custom_call.1}
  #allocation0 [shape = 'u32[]', space=smem, size = 0x4, offset = 0x4, fixed_abs, tag = 'smem constant byte address 0x4 - core index']
  #allocation1 [shape = 'u32[72,128]{1,0:T(1,128)}', space=vmem, size = 0x9000, scoped, tag = 'internal scratch']
  %s0 = inlined_call_operand.hbm [shape: bf16[128,128], index: 0, kind: input, shape index: {}]
  %s1 = inlined_call_operand.hbm [shape: bf16[128,128], index: 1, kind: input, shape index: {}]
  %s2 = inlined_call_operand.hbm [shape: bf16[128,128], index: 2, kind: output, shape index: {0}]
  %s3 = inlined_call_operand.hbm [shape: f32[2,2,128], index: 3, kind: output, shape index: {1}]
  %4 = xla_tuple %s2, %s3
  %s5 = sld [smem:[#allocation0]]
  $region57: #{tpu_custom_call.1} parent=0
    _
  %s7 = ssub.s32 1, %s5
  %s8 = scalar_select 0, %s7, %s5
  $region1: #{tpu_custom_call.1} parent=0
    #allocation2 [shape = 'u8[32768]{0}', space=vmem, size = 0x8000, scoped, tag = 'input window, operand 0']
    #allocation3 [shape = 's32[2]{0}', space=sflag, size = 0x8, scoped, tag = 'scoped memory for tpu_custom_call.1']
    #allocation4 [shape = 's32[2]{0}', space=sflag, size = 0x8, scoped, tag = 'scoped memory for tpu_custom_call.1']
    #allocation5 [shape = 'u8[32768]{0}', space=vmem, size = 0x8000, scoped, tag = 'input window, operand 1, single buffered']
    #allocation6 [shape = 's32[1]{0}', space=sflag, size = 0x4, scoped, tag = 'scoped memory for tpu_custom_call.1']
    #allocation7 [shape = 'u8[32768]{0}', space=vmem, size = 0x8000, scoped, tag = 'output window, operand 0']
    #allocation8 [shape = 'u8[2048]{0}', space=vmem, size = 0x800, scoped, tag = 'output window, operand 1']
    #allocation9 [shape = 's32[2]{0}', space=sflag, size = 0x8, scoped, tag = 'scoped memory for tpu_custom_call.1']
    %9 = vsyncpa [#allocation3], 0
    %s10 = scalar_lea.sflag [#allocation3], 1
    %11 = vsyncpa %s10, 0
    %12 = vsyncpa [#allocation6], 0
    %13 = vsyncpa [#allocation4], 0
    %s14 = scalar_lea.sflag [#allocation4], 1
    %15 = vsyncpa %s14, 0
    %16 = vsyncpa [#allocation9], 0
    %s17 = scalar_lea.sflag [#allocation9], 1
    %18 = vsyncpa %s17, 0
    loop: start=0, step=1, limit=4
    $region2: #{tpu_custom_call.1} parent=1 // loop_pre_header
      _
    $region3: #{tpu_custom_call.1} parent=1 // loop_header
      %s20 = sphi 0, %s24
      %p21 = scmp.ge.s32.totalorder %s20, 4
      %s30 = sphi 0, %s32
      %s33 = sphi 0, %s30
      %s34 = sphi 0, %s33
      %s50 = sphi 0, %s34
      %s54 = sphi 0, %s54
      %s56 = sphi 0, %s54
      %s57 = sphi 0, %s56
      %s71 = sphi 0, %s57
      %s77 = sphi 0, %s79
      %s80 = sphi 0, %s77
      %s81 = sphi 0, %s80
      %s97 = sphi 0, %s81
      %s103 = sphi 0, %s105
      %s106 = sphi 0, %s103
      %s107 = sphi 0, %s106
      %s123 = sphi 0, %s107
    $region4: #{tpu_custom_call.1} parent=1 // loop_header_branch
      %23 = sbr.rel (%p21) target = $region8
    $region5: #{tpu_custom_call.1} parent=1 // loop_body
      %s25 = ssub.s32 %s20, 1
      %s26 = ssub.s32 %s20, 2
      %s27 = sadd.s32 %s20, 1
      %s28 = ssub.s32 %s20, %s27
      %p29 = scmp.eq.s32.totalorder %s28, 0
      %s31 = sadd.s32 %s30, 1
      %s32 = scalar_select %p29, %s30, %s31
      %p35 = pneg %p29
      %p36 = scmp.eq.s32.totalorder %s20, 1
      %p37 = por %p35, %p36
      %p38 = scmp.ne.s32.totalorder %s30, %s33
      %p39 = scmp.eq.s32.totalorder %s20, 0
      %p40 = por %p38, %p39
      %p41 = scmp.ne.s32.totalorder %s30, %s33
      %p42 = scmp.eq.s32.totalorder %s25, 1
      %p43 = por %p41, %p42
      %p44 = scmp.ne.s32.totalorder %s33, %s34
      %p45 = scmp.eq.s32.totalorder %s25, 0
      %p46 = por %p44, %p45
      %p47 = scmp.ne.s32.totalorder %s33, %s34
      %p48 = scmp.eq.s32.totalorder %s26, 1
      %p49 = por %p47, %p48
      %p51 = scmp.ne.s32.totalorder %s34, %s50
      %p52 = scmp.eq.s32.totalorder %s26, 0
      %p53 = por %p51, %p52
      %s55 = sadd.s32 %s54, 1
      %p58 = scmp.eq.s32.totalorder %s20, 1
      %p59 = scmp.ne.s32.totalorder %s54, %s56
      %p60 = scmp.eq.s32.totalorder %s20, 0
      %p61 = por %p59, %p60
      %p62 = scmp.ne.s32.totalorder %s54, %s56
      %p63 = scmp.eq.s32.totalorder %s25, 1
      %p64 = por %p62, %p63
      %p65 = scmp.ne.s32.totalorder %s56, %s57
      %p66 = scmp.eq.s32.totalorder %s25, 0
      %p67 = por %p65, %p66
      %p68 = scmp.ne.s32.totalorder %s56, %s57
      %p69 = scmp.eq.s32.totalorder %s26, 1
      %p70 = por %p68, %p69
      %p72 = scmp.ne.s32.totalorder %s57, %s71
      %p73 = scmp.eq.s32.totalorder %s26, 0
      %p74 = por %p72, %p73
      %s75 = ssub.s32 %s20, %s27
      %p76 = scmp.eq.s32.totalorder %s75, 0
      %s78 = sadd.s32 %s77, 1
      %s79 = scalar_select %p76, %s77, %s78
      %p82 = pneg %p76
      %p83 = scmp.eq.s32.totalorder %s20, 1
      %p84 = por %p82, %p83
      %p85 = scmp.ne.s32.totalorder %s77, %s80
      %p86 = scmp.eq.s32.totalorder %s20, 0
      %p87 = por %p85, %p86
      %p88 = scmp.ne.s32.totalorder %s77, %s80
      %p89 = scmp.eq.s32.totalorder %s25, 1
      %p90 = por %p88, %p89
      %p91 = scmp.ne.s32.totalorder %s80, %s81
      %p92 = scmp.eq.s32.totalorder %s25, 0
      %p93 = por %p91, %p92
      %p94 = scmp.ne.s32.totalorder %s80, %s81
      %p95 = scmp.eq.s32.totalorder %s26, 1
      %p96 = por %p94, %p95
      %p98 = scmp.ne.s32.totalorder %s81, %s97
      %p99 = scmp.eq.s32.totalorder %s26, 0
      %p100 = por %p98, %p99
      %s101 = ssub.s32 %s20, %s27
      %p102 = scmp.eq.s32.totalorder %s101, 0
      %s104 = sadd.s32 %s103, 1
      %s105 = scalar_select %p102, %s103, %s104
      %p108 = pneg %p102
      %p109 = scmp.eq.s32.totalorder %s20, 1
      %p110 = por %p108, %p109
      %p111 = scmp.ne.s32.totalorder %s103, %s106
      %p112 = scmp.eq.s32.totalorder %s20, 0
      %p113 = por %p111, %p112
      %p114 = scmp.ne.s32.totalorder %s103, %s106
      %p115 = scmp.eq.s32.totalorder %s25, 1
      %p116 = por %p114, %p115
      %p117 = scmp.ne.s32.totalorder %s106, %s107
      %p118 = scmp.eq.s32.totalorder %s25, 0
      %p119 = por %p117, %p118
      %p120 = scmp.ne.s32.totalorder %s106, %s107
      %p121 = scmp.eq.s32.totalorder %s26, 1
      %p122 = por %p120, %p121
      %p124 = scmp.ne.s32.totalorder %s107, %s123
      %p125 = scmp.eq.s32.totalorder %s26, 0
      %p126 = por %p124, %p125
      %p127 = scmp.le.s32.totalorder 1, %s20
      %p128 = scmp.lt.s32.totalorder %s20, 3
      %p129 = pnand %p127, %p128
      %p130 = pneg %p129
      // Predicated region
      $region9: #{tpu_custom_call.1} parent=5 // pred_check
        _
      $region10: #{tpu_custom_call.1} parent=5 // pred_check_branch
        %132 = sbr.rel (%p129) target = $region12
      $region11: #{tpu_custom_call.1} parent=5 // pred_region
        %s133 = ssub.s32 %s20, 1
        // Predicated region
        $region13: #{tpu_custom_call.1} parent=11 // pred_check
          %p134 = pneg %p67
        $region14: #{tpu_custom_call.1} parent=11 // pred_check_branch
          %136 = sbr.rel (%p134) target = $region16
        $region15: #{tpu_custom_call.1} parent=11 // pred_region
          %138 = vsyncadd [#allocation6], 0
          %s139 = sshll.u32 %s1, 4
          %s140 = int_to_ptr.hbm [resolvable:$true] %s139
          %s141 = sshll.u32 [#allocation5], 4
          %s142 = int_to_ptr.vmem [resolvable:$true] %s141
          %147 = dma.hbm_to_vmem [thread:$0]  %s140, 1024, %s142, [#allocation6], 64, 64, 4
        $region16: #{tpu_custom_call.1} parent=11 // pred_fallthru
          _
      $region12: #{tpu_custom_call.1} parent=5 // pred_fallthru
        _
      %p148 = scmp.lt.s32.totalorder %s20, 2
      // Predicated region
      $region17: #{tpu_custom_call.1} parent=5 // pred_check
        %p149 = pneg %p148
      $region18: #{tpu_custom_call.1} parent=5 // pred_check_branch
        %151 = sbr.rel (%p149) target = $region20
      $region19: #{tpu_custom_call.1} parent=5 // pred_region
        // Predicated region
        $region21: #{tpu_custom_call.1} parent=19 // pred_check
          %p152 = pneg %p40
        $region22: #{tpu_custom_call.1} parent=19 // pred_check_branch
          %154 = sbr.rel (%p152) target = $region24
        $region23: #{tpu_custom_call.1} parent=19 // pred_region
          %s155 = sand.u32 %s30, 1
          %s156 = scalar_lea.sflag [#allocation3], %s155
          %s157 = sand.u32 %s30, 1
          %s158 = smul.addr %s157, 32
          %s159 = scalar_lea.vmem [#allocation2], %s158
          %s160 = smul.u32 8, %s20
          %162 = vsyncadd %s156, 0
          %s163 = smul.addr %s160, 4
          %s164 = scalar_lea.hbm %s0, %s163
          %s165 = sshll.u32 %s164, 4
          %s166 = int_to_ptr.hbm [resolvable:$true] %s165
          %s167 = sshll.u32 %s159, 4
          %s168 = int_to_ptr.vmem [resolvable:$true] %s167
          %173 = dma.hbm_to_vmem [thread:$0]  %s166, 512, %s168, %s156, 64, 64, 4
        $region24: #{tpu_custom_call.1} parent=19 // pred_fallthru
          _
      $region20: #{tpu_custom_call.1} parent=5 // pred_fallthru
        _
      %p174 = scmp.le.s32.totalorder 1, %s20
      %p175 = scmp.lt.s32.totalorder %s20, 3
      %p176 = pnand %p174, %p175
      %p177 = pneg %p176
      // Predicated region
      $region25: #{tpu_custom_call.1} parent=5 // pred_check
        _
      $region26: #{tpu_custom_call.1} parent=5 // pred_check_branch
        %179 = sbr.rel (%p176) target = $region28
      $region27: #{tpu_custom_call.1} parent=5 // pred_region
        %s180 = ssub.s32 %s20, 1
        %s181 = sand.u32 %s33, 1
        %s182 = scalar_lea.sflag [#allocation3], %s181
        %s183 = sand.u32 %s33, 1
        %s184 = smul.addr %s183, 32
        %s185 = scalar_lea.vmem [#allocation2], %s184
        // Predicated region
        $region29: #{tpu_custom_call.1} parent=27 // pred_check
          %p186 = pneg %p46
        $region30: #{tpu_custom_call.1} parent=27 // pred_check_branch
          %188 = sbr.rel (%p186) target = $region32
        $region31: #{tpu_custom_call.1} parent=27 // pred_region
          %190 = dma.done %s182, 512
        $region32: #{tpu_custom_call.1} parent=27 // pred_fallthru
          _
        // Predicated region
        $region33: #{tpu_custom_call.1} parent=27 // pred_check
          %p191 = pneg %p67
        $region34: #{tpu_custom_call.1} parent=27 // pred_check_branch
          %193 = sbr.rel (%p191) target = $region36
        $region35: #{tpu_custom_call.1} parent=27 // pred_region
          %195 = dma.done [#allocation6], 1024
        $region36: #{tpu_custom_call.1} parent=27 // pred_fallthru
          _
        %s196 = sand.u32 %s33, 1
        %s197 = scalar_lea.sflag [#allocation3], %s196
        %s198 = sand.u32 %s33, 1
        %s199 = smul.addr %s198, 32
        %s200 = scalar_lea.vmem [#allocation2], %s199
        %p201 = pneg %p46
        %p202 = pneg %p43
        %p203 = pneg %p67
        %p204 = pneg %p64
        %p205 = pneg %p93
        %p206 = pneg %p90
        %s207 = sand.u32 %s80, 1
        %s208 = scalar_lea.sflag [#allocation4], %s207
        %s209 = sand.u32 %s80, 1
        %s210 = smul.addr %s209, 32
        %s211 = scalar_lea.vmem [#allocation7], %s210
        %p212 = pneg %p119
        %p213 = pneg %p116
        %s214 = sand.u32 %s106, 1
        %s215 = scalar_lea.sflag [#allocation9], %s214
        %s216 = sand.u32 %s106, 1
        %s217 = smul.addr %s216, 2
        %s218 = scalar_lea.vmem [#allocation8], %s217
        %s219 = smul.u32 8, %s25
        %s220 = smul.u32 8, %s25
        %v221 = vld [vmem:[%s185] sm:$0xf]
        %v222 = vld [vmem:[%s185 + $0x4] sm:$0xf]
        %v223 = vld [vmem:[%s185 + $0x8] sm:$0xf]
        %v224 = vld [vmem:[%s185 + $0xc] sm:$0xf]
        %v225 = vld [vmem:[%s185 + $0x10] sm:$0xf]
        %v226 = vld [vmem:[%s185 + $0x14] sm:$0xf]
        %v227 = vld [vmem:[%s185 + $0x18] sm:$0xf]
        %v228 = vld [vmem:[%s185 + $0x1c] sm:$0xf]
        %v229 = vld [vmem:[#allocation5] sm:$0xf]
        %v230 = vld [vmem:[#allocation5 + $0x4] sm:$0xf]
        %v231 = vld [vmem:[#allocation5 + $0x8] sm:$0xf]
        %v232 = vld [vmem:[#allocation5 + $0xc] sm:$0xf]
        %v233 = vld [vmem:[#allocation5 + $0x10] sm:$0xf]
        %v234 = vld [vmem:[#allocation5 + $0x14] sm:$0xf]
        %v235 = vld [vmem:[#allocation5 + $0x18] sm:$0xf]
        %v236 = vld [vmem:[#allocation5 + $0x1c] sm:$0xf]
        %v237 = vld [vmem:[#allocation5 + $0x20] sm:$0xf]
        %v238 = vld [vmem:[#allocation5 + $0x24] sm:$0xf]
        %v239 = vld [vmem:[#allocation5 + $0x28] sm:$0xf]
        %v240 = vld [vmem:[#allocation5 + $0x2c] sm:$0xf]
        %v241 = vld [vmem:[#allocation5 + $0x30] sm:$0xf]
        %v242 = vld [vmem:[#allocation5 + $0x34] sm:$0xf]
        %v243 = vld [vmem:[#allocation5 + $0x38] sm:$0xf]
        %v244 = vld [vmem:[#allocation5 + $0x3c] sm:$0xf]
        %v253 = vunpack.c.l.b16 %v221
        %v254 = vunpack.c.l.b16 %v222
        %v255 = vunpack.c.l.b16 %v223
        %v256 = vunpack.c.l.b16 %v224
        %v257 = vunpack.c.l.b16 %v225
        %v258 = vunpack.c.l.b16 %v226
        %v259 = vunpack.c.l.b16 %v227
        %v260 = vunpack.c.l.b16 %v228
        %v261 = vpack.c.b16 %v254, %v253
        %v262 = vpack.c.b16 %v256, %v255
        %v263 = vpack.c.b16 %v258, %v257
        %v264 = vpack.c.b16 %v260, %v259
        %v285 = vunpack.c.l.b16 %v229
        %v286 = vunpack.c.l.b16 %v230
        %v287 = vunpack.c.l.b16 %v231
        %v288 = vunpack.c.l.b16 %v232
        %v289 = vunpack.c.l.b16 %v233
        %v290 = vunpack.c.l.b16 %v234
        %v291 = vunpack.c.l.b16 %v235
        %v292 = vunpack.c.l.b16 %v236
        %v293 = vunpack.c.l.b16 %v237
        %v294 = vunpack.c.l.b16 %v238
        %v295 = vunpack.c.l.b16 %v239
        %v296 = vunpack.c.l.b16 %v240
        %v297 = vunpack.c.l.b16 %v241
        %v298 = vunpack.c.l.b16 %v242
        %v299 = vunpack.c.l.b16 %v243
        %v300 = vunpack.c.l.b16 %v244
        %v301 = vpack.c.b16 %v286, %v285
        %v302 = vpack.c.b16 %v288, %v287
        %v303 = vpack.c.b16 %v290, %v289
        %v304 = vpack.c.b16 %v292, %v291
        %v305 = vpack.c.b16 %v294, %v293
        %v306 = vpack.c.b16 %v296, %v295
        %v307 = vpack.c.b16 %v298, %v297
        %v308 = vpack.c.b16 %v300, %v299
        %317 = vmatpush.bf16.msra.mxu0 %v308
        %318 = vmatpush.bf16.msra.mxu0 %v307
        %319 = vmatpush.bf16.msra.mxu0 %v306
        %320 = vmatpush.bf16.msra.mxu0 %v305
        %321 = vmatpush.bf16.msra.mxu0 %v304
        %322 = vmatpush.bf16.msra.mxu0 %v303
        %323 = vmatpush.bf16.msra.mxu0 %v302
        %324 = vmatpush.bf16.msra.mxu0 %v301
        %325 = vmatmul.bf16.gmra.mxu0 %v261
        %v326 = vpop.f32.mrf.mxu0
        %v327 = vadd.f32 0.0, %v326
        %v328 = vpop.f32.mrf.mxu0
        %v329 = vadd.f32 0.0, %v328
        %330 = vmatmul.bf16.gmra.mxu0 %v262
        %v331 = vpop.f32.mrf.mxu0
        %v332 = vadd.f32 0.0, %v331
        %v333 = vpop.f32.mrf.mxu0
        %v334 = vadd.f32 0.0, %v333
        %335 = vmatmul.bf16.gmra.mxu0 %v263
        %v336 = vpop.f32.mrf.mxu0
        %v337 = vadd.f32 0.0, %v336
        %v338 = vpop.f32.mrf.mxu0
        %v339 = vadd.f32 0.0, %v338
        %340 = vmatmul.bf16.gmra.mxu0 %v264
        %v341 = vpop.f32.mrf.mxu0
        %v342 = vadd.f32 0.0, %v341
        %v343 = vpop.f32.mrf.mxu0
        %v344 = vadd.f32 0.0, %v343
        %345 = vdwg.mxu0
        %v346 = vpack.c.bf16 %v327, %v327
        %v347 = vpack.c.bf16 %v329, %v329
        %v348 = vpack.c.bf16 %v332, %v332
        %v349 = vpack.c.bf16 %v334, %v334
        %v350 = vpack.c.bf16 %v337, %v337
        %v351 = vpack.c.bf16 %v339, %v339
        %v352 = vpack.c.bf16 %v342, %v342
        %v353 = vpack.c.bf16 %v344, %v344
        %354 = vst [vmem:[%s211] sm:$0xf] %v346
        %355 = vst [vmem:[%s211 + $0x4] sm:$0xf] %v347
        %356 = vst [vmem:[%s211 + $0x8] sm:$0xf] %v348
        %357 = vst [vmem:[%s211 + $0xc] sm:$0xf] %v349
        %358 = vst [vmem:[%s211 + $0x10] sm:$0xf] %v350
        %359 = vst [vmem:[%s211 + $0x14] sm:$0xf] %v351
        %360 = vst [vmem:[%s211 + $0x18] sm:$0xf] %v352
        %361 = vst [vmem:[%s211 + $0x1c] sm:$0xf] %v353
        %v362 = vlaneseq
        %v363 = vshrl.u32 %v362, 7
        %v364 = vadd.s32 %v363, 8
        %v365 = vadd.s32 %v363, 16
        %v366 = vadd.s32 %v363, 24
        %v367 = vadd.s32 %v363, 32
        %v368 = vadd.s32 %v363, 40
        %v369 = vadd.s32 %v363, 48
        %v370 = vadd.s32 %v363, 56
        %s371 = smul.u32 %s25, 64
        %v372 = vstv %s371
        %v373 = vadd.s32 %v363, %v372
        %v374 = vadd.s32 %v364, %v372
        %v375 = vadd.s32 %v365, %v372
        %v376 = vadd.s32 %v366, %v372
        %v377 = vadd.s32 %v367, %v372
        %v378 = vadd.s32 %v368, %v372
        %v379 = vadd.s32 %v369, %v372
        %v380 = vadd.s32 %v370, %v372
        %vm381 = vcmp.lt.s32.totalorder %v373, 128
        %vm382 = vcmp.lt.s32.totalorder %v374, 128
        %vm383 = vcmp.lt.s32.totalorder %v375, 128
        %vm384 = vcmp.lt.s32.totalorder %v376, 128
        %vm385 = vcmp.lt.s32.totalorder %v377, 128
        %vm386 = vcmp.lt.s32.totalorder %v378, 128
        %vm387 = vcmp.lt.s32.totalorder %v379, 128
        %vm388 = vcmp.lt.s32.totalorder %v380, 128
        %v389 = vsel %vm381, 1, 0
        %v390 = vsel %vm382, 1, 0
        %v391 = vsel %vm383, 1, 0
        %v392 = vsel %vm384, 1, 0
        %v393 = vsel %vm385, 1, 0
        %v394 = vsel %vm386, 1, 0
        %v395 = vsel %vm387, 1, 0
        %v396 = vsel %vm388, 1, 0
        %v397 = vcvt.s32.f32 %v389
        %v398 = vcvt.s32.f32 %v390
        %v399 = vcvt.s32.f32 %v391
        %v400 = vcvt.s32.f32 %v392
        %v401 = vcvt.s32.f32 %v393
        %v402 = vcvt.s32.f32 %v394
        %v403 = vcvt.s32.f32 %v395
        %v404 = vcvt.s32.f32 %v396
        %s405 = ssub.s32 128, %s371
        %p406 = scmp.lt.s32.totalorder %s405, 64
        %s407 = scalar_select %p406, %s405, 64
        %p408 = scmp.gt.s32.totalorder %s407, 1
        %s409 = scalar_select %p408, %s407, 1
        %s410 = scvt.s32.f32 %s409
        %v411 = vmul.f32 %v327, %v397
        %v412 = vmul.f32 %v329, %v398
        %v413 = vmul.f32 %v332, %v399
        %v414 = vmul.f32 %v334, %v400
        %v415 = vmul.f32 %v337, %v401
        %v416 = vmul.f32 %v339, %v402
        %v417 = vmul.f32 %v342, %v403
        %v418 = vmul.f32 %v344, %v404
        %v419 = vadd.f32 %v411, %v412
        %v420 = vadd.f32 %v419, %v413
        %v421 = vadd.f32 %v420, %v414
        %v422 = vadd.f32 %v421, %v415
        %v423 = vadd.f32 %v422, %v416
        %v424 = vadd.f32 %v423, %v417
        %v425 = vadd.f32 %v424, %v418
        %v426 = vrot.slane %v425, 4
        %v427 = vadd.f32 %v425, %v426
        %v428 = vrot.slane %v427, 2
        %v429 = vadd.f32 %v427, %v428
        %v430 = vrot.slane %v429, 1
        %v431 = vadd.f32 %v429, %v430
        %v432 = vstv %s410
        %v433 = vrcp.pop %v432
        %v434 = vmul.f32 %v432, %v433
        %v435 = vsub.f32 1.0, %v434
        %v436 = vmul.f32 %v433, %v435
        %v437 = vadd.f32 %v433, %v436
        %vm438 = vweird.f32 %v432
        %vm439 = vweird.f32 %v433
        %vm440 = vmor %vm438, %vm439
        %v441 = vsel %vm440, %v433, %v437
        %v442 = vand.u32 2147483647, %v432
        %vm443 = vcmp.eq.f32.partialorder %v442, 8.507059e+37
        %v444 = vand.u32 %v432, 2147483648
        %v445 = vor.u32 1.1754944e-38, %v444
        %v446 = vsel %vm443, %v445, %v441
        %v447 = vmul.f32 %v431, %v446
        %v448 = vsub.f32 %v411, %v447
        %v449 = vsub.f32 %v412, %v447
        %v450 = vsub.f32 %v413, %v447
        %v451 = vsub.f32 %v414, %v447
        %v452 = vsub.f32 %v415, %v447
        %v453 = vsub.f32 %v416, %v447
        %v454 = vsub.f32 %v417, %v447
        %v455 = vsub.f32 %v418, %v447
        %v456 = vmul.f32 %v448, %v397
        %v457 = vmul.f32 %v449, %v398
        %v458 = vmul.f32 %v450, %v399
        %v459 = vmul.f32 %v451, %v400
        %v460 = vmul.f32 %v452, %v401
        %v461 = vmul.f32 %v453, %v402
        %v462 = vmul.f32 %v454, %v403
        %v463 = vmul.f32 %v455, %v404
        %v464 = vmul.f32 %v456, %v456
        %v465 = vmul.f32 %v457, %v457
        %v466 = vmul.f32 %v458, %v458
        %v467 = vmul.f32 %v459, %v459
        %v468 = vmul.f32 %v460, %v460
        %v469 = vmul.f32 %v461, %v461
        %v470 = vmul.f32 %v462, %v462
        %v471 = vmul.f32 %v463, %v463
        %v472 = vadd.f32 %v464, %v465
        %v473 = vadd.f32 %v472, %v466
        %v474 = vadd.f32 %v473, %v467
        %v475 = vadd.f32 %v474, %v468
        %v476 = vadd.f32 %v475, %v469
        %v477 = vadd.f32 %v476, %v470
        %v478 = vadd.f32 %v477, %v471
        %v479 = vrot.slane %v478, 4
        %v480 = vadd.f32 %v478, %v479
        %v481 = vrot.slane %v480, 2
        %v482 = vadd.f32 %v480, %v481
        %v483 = vrot.slane %v482, 1
        %v484 = vadd.f32 %v482, %v483
        %vm485 = vcmask 1040384
        %v486 = vsel %vm485, %v431, %v484
        %487 = vst [vmem:[%s218] sm:$0x3] %v486
        %s488 = sand.u32 %s80, 1
        %s489 = scalar_lea.sflag [#allocation4], %s488
        %s490 = sand.u32 %s80, 1
        %s491 = smul.addr %s490, 32
        %s492 = scalar_lea.vmem [#allocation7], %s491
        %s493 = sand.u32 %s106, 1
        %s494 = scalar_lea.sflag [#allocation9], %s493
        %s495 = sand.u32 %s106, 1
        %s496 = smul.addr %s495, 2
        %s497 = scalar_lea.vmem [#allocation8], %s496
        // Predicated region
        $region37: #{tpu_custom_call.1} parent=27 // pred_check
          %p498 = pneg %p90
        $region38: #{tpu_custom_call.1} parent=27 // pred_check_branch
          %500 = sbr.rel (%p498) target = $region40
        $region39: #{tpu_custom_call.1} parent=27 // pred_region
          %s501 = smul.u32 8, %s25
          %503 = vsyncadd %s489, 0
          %s504 = smul.addr %s501, 4
          %s505 = scalar_lea.hbm %s2, %s504
          %s506 = sshll.u32 %s492, 4
          %s507 = int_to_ptr.vmem [resolvable:$true] %s506
          %s508 = sshll.u32 %s505, 4
          %s509 = int_to_ptr.hbm [resolvable:$true] %s508
          %514 = dma.vmem_to_hbm [thread:$0]  %s507, 512, %s509, %s489, 64, 64, 4
        $region40: #{tpu_custom_call.1} parent=27 // pred_fallthru
          _
        // Predicated region
        $region41: #{tpu_custom_call.1} parent=27 // pred_check
          %p515 = pneg %p116
        $region42: #{tpu_custom_call.1} parent=27 // pred_check_branch
          %517 = sbr.rel (%p515) target = $region44
        $region43: #{tpu_custom_call.1} parent=27 // pred_region
          %519 = vsyncadd %s494, 0
          %s520 = smul.addr %s25, 2
          %s521 = scalar_lea.hbm %s3, %s520
          %s523 = sshll.u32 %s497, 4
          %s524 = int_to_ptr.vmem [resolvable:$true] %s523
          %s525 = sshll.u32 %s521, 4
          %s526 = int_to_ptr.hbm [resolvable:$true] %s525
          %528 = dma.vmem_to_hbm [thread:$0]  %s524, 32, %s526, %s494
        $region44: #{tpu_custom_call.1} parent=27 // pred_fallthru
          _
      $region28: #{tpu_custom_call.1} parent=5 // pred_fallthru
        _
      %p529 = scmp.le.s32.totalorder 2, %s20
      // Predicated region
      $region45: #{tpu_custom_call.1} parent=5 // pred_check
        %p530 = pneg %p529
      $region46: #{tpu_custom_call.1} parent=5 // pred_check_branch
        %532 = sbr.rel (%p530) target = $region48
      $region47: #{tpu_custom_call.1} parent=5 // pred_region
        %s533 = ssub.s32 %s20, 2
        // Predicated region
        $region49: #{tpu_custom_call.1} parent=47 // pred_check
          %p534 = pneg %p96
        $region50: #{tpu_custom_call.1} parent=47 // pred_check_branch
          %536 = sbr.rel (%p534) target = $region52
        $region51: #{tpu_custom_call.1} parent=47 // pred_region
          %s537 = sand.u32 %s81, 1
          %s538 = scalar_lea.sflag [#allocation4], %s537
          %s539 = sand.u32 %s81, 1
          %s540 = smul.addr %s539, 32
          %s541 = scalar_lea.vmem [#allocation7], %s540
          %543 = dma.done %s538, 512
        $region52: #{tpu_custom_call.1} parent=47 // pred_fallthru
          _
        // Predicated region
        $region53: #{tpu_custom_call.1} parent=47 // pred_check
          %p544 = pneg %p122
        $region54: #{tpu_custom_call.1} parent=47 // pred_check_branch
          %546 = sbr.rel (%p544) target = $region56
        $region55: #{tpu_custom_call.1} parent=47 // pred_region
          %s547 = sand.u32 %s107, 1
          %s548 = scalar_lea.sflag [#allocation9], %s547
          %s549 = sand.u32 %s107, 1
          %s550 = smul.addr %s549, 2
          %s551 = scalar_lea.vmem [#allocation8], %s550
          %553 = dma.done %s548, 32
        $region56: #{tpu_custom_call.1} parent=47 // pred_fallthru
          _
      $region48: #{tpu_custom_call.1} parent=5 // pred_fallthru
        _
    $region6: #{tpu_custom_call.1} parent=1 // loop_footer
      %s24 = sadd.s32 1, %s20
    $region7: #{tpu_custom_call.1} parent=1 // loop_footer_branch
      %19 = sbr.rel target = $region3
    $region8: #{tpu_custom_call.1} parent=1 // loop_exit
      _
    %554 = vsyncpa [#allocation3], 1
    %s555 = scalar_lea.sflag [#allocation3], 1
    %556 = vsyncpa %s555, 1
    %557 = vsyncpa [#allocation6], 1
    %558 = vsyncpa [#allocation4], 1
    %s559 = scalar_lea.sflag [#allocation4], 1
    %560 = vsyncpa %s559, 1
    %561 = vsyncpa [#allocation9], 1
    %s562 = scalar_lea.sflag [#allocation9], 1
    %563 = vsyncpa %s562, 1

</llo_original>
